<compile_context>
chip_gen: v7x
topology: tpu7x:2x2x1
jax: 0.10.0
libtpu: 0.0.40
codegen_flags: <defaults>
</compile_context>

<pallas_src>
import functools

import jax
import jax.numpy as jnp
from jax.experimental import pallas as pl
from jax.experimental.pallas import tpu as pltpu

LANE_WIDTH = 512            # last dim: large multiple of 128 -> unmasked vst
DEFAULT_TILE_ROWS = 2048    # 2048 x 512 f32 = 4 MiB per block


def _quannet_kernel(x_ref, o_ref, *, ins, inz, outs, outz, qmax):
    """Elementwise quantize -> (identity forward_) -> dequantize on one tile."""
    # Cast in-kernel: native-dtype HBM reads, f32 compute (free under DMA).
    x = x_ref[...].astype(jnp.float32)

    # utils.float2fixed_point_SZ_tensor(x, ins, inz): q = round(x / s) + z
    q = jnp.round(x / ins) + inz
    # torch.clamp(x, 0, 255)   (qmax == 2**n_bits - 1 == 255 for n_bits=8)
    q = jnp.clip(q, 0.0, qmax)

    # forward_(x): abstract (raises NotImplementedError in the base class).
    # TODO(synk): QuanNet.forward_ is abstract; subclasses stack layers here.
    y_q = q

    # utils.fixed_point2float_tensor(q, outs, outz): y = (q - z) * s
    o_ref[...] = ((y_q - outz) * outs).astype(o_ref.dtype)


def quannet_forward(x, *, ins, inz, outs, outz, quan_mode=True,
                    tile_rows=DEFAULT_TILE_ROWS, clamp_max=255.0,
                    out_dtype=None, donate_input=False):
    """Run the QuanNet forward pass on an arbitrary-shaped float array."""
    if not quan_mode:
        # float mode: forward(x) == forward_(x) (abstract -> identity here).
        return x

    assert float(ins) != 0.0, "input scale must be non-zero (call quantize() first)"

    orig_shape = x.shape
    total = int(x.size)
    out_dtype = x.dtype if out_dtype is None else jnp.dtype(out_dtype)

    # Flatten to a lane-dense 2D slab (rows, LANE_WIDTH).  Pad at most
    # LANE_WIDTH-1 elements (only when total is not already a multiple);
    # row-tiling tails are handled by Pallas partial blocks, not padding.
    rows = pl.cdiv(total, LANE_WIDTH)
    padded_total = rows * LANE_WIDTH
    needs_pad = padded_total != total

    x_flat = x.reshape(-1)
    if needs_pad:
        x_flat = jnp.pad(x_flat, (0, padded_total - total))
    x2d = x_flat.reshape(rows, LANE_WIDTH)

    # Tile rows: either the full row extent (small inputs) or a sublane-aligned
    # 4 MiB block; grid = cdiv so the last block may be partial (masked stores).
    tr = min(int(tile_rows), int(rows))
    grid = pl.cdiv(rows, tr)

    kernel = functools.partial(
        _quannet_kernel,
        ins=float(ins), inz=float(inz),
        outs=float(outs), outz=float(outz),
        qmax=float(clamp_max))

    io_aliases = {}
    if donate_input and not needs_pad and x2d.dtype == out_dtype:
        io_aliases = {0: 0}   # write result in place over x2d

    in_bytes = padded_total * jnp.dtype(x2d.dtype).itemsize
    out_bytes = padded_total * jnp.dtype(out_dtype).itemsize

    out2d = pl.pallas_call(
        kernel,
        out_shape=jax.ShapeDtypeStruct((rows, LANE_WIDTH), out_dtype),
        grid=(grid,),
        in_specs=[pl.BlockSpec((tr, LANE_WIDTH), lambda i: (i, 0))],
        out_specs=pl.BlockSpec((tr, LANE_WIDTH), lambda i: (i, 0)),
        input_output_aliases=io_aliases,
        compiler_params=pltpu.CompilerParams(
            # Elementwise, independent blocks -> shard across TCs where possible.
            dimension_semantics=("parallel",),
            # 4 MiB blocks x 2 operands x 2 buffers = 16 MiB; raise the scoped
            # limit so v5e's 16 MiB default is not a hard ceiling.
            vmem_limit_bytes=32 * 1024 * 1024),
        cost_estimate=pl.CostEstimate(
            flops=7 * padded_total,
            transcendentals=0,
            bytes_accessed=in_bytes + out_bytes),
    )(x2d)

    out_flat = out2d.reshape(-1)
    if needs_pad:
        out_flat = out_flat[:total]
    return out_flat.reshape(orig_shape)


def quannet_reference(x, *, ins, inz, outs, outz, clamp_max=255.0):
    """Pure-JAX reference mirroring the PyTorch formulas exactly."""
    xf = x.astype(jnp.float32)
    q = jnp.round(xf / ins) + inz
    q = jnp.clip(q, 0.0, clamp_max)
    return ((q - outz) * outs).astype(x.dtype)


if __name__ == "__main__":
    key = jax.random.PRNGKey(0)
    # small NCHW input consistent with a conv-style QuanNet subclass
    x = jax.random.normal(key, (2, 4, 16, 16), dtype=jnp.float32)

    # QuanNet.__init__ registers scalar buffers _ins,_inz,_outs,_outz = 0.0.
    # Zero scales are degenerate (div-by-zero), so we initialize them
    # deterministically to values a call to quantize() would produce.
    n_bits = 8
    ins, inz = 0.025, 128      # input scale / zero-point
    outs, outz = 0.025, 128    # output scale / zero-point
    clamp_max = float(2 ** n_bits - 1)   # == 255, matches the module's clamp

    y = quannet_forward(x, ins=ins, inz=inz, outs=outs, outz=outz,
                        quan_mode=True, clamp_max=clamp_max)
    y = jax.block_until_ready(y)

    y_ref = quannet_reference(x, ins=ins, inz=inz, outs=outs, outz=outz,
                              clamp_max=clamp_max)
    assert y.shape == x.shape
    assert y.dtype == x.dtype
    assert jnp.allclose(y, y_ref, atol=1e-5, rtol=1e-5)

    # float-mode path: forward() == forward_() (identity here)
    y_float = quannet_forward(x, ins=ins, inz=inz, outs=outs, outz=outz,
                              quan_mode=False)
    assert jnp.array_equal(y_float, x)

    print("KERNEL_OK")
</pallas_src>

<mosaic_0001>
module attributes {stable_mosaic.version = 11 : i64} {
  func.func @_quannet_kernel(%arg0: i32, %arg1: memref<4x512xf32, #tpu.memory_space<vmem>>, %arg2: memref<4x512xf32, #tpu.memory_space<vmem>>) attributes {dimension_semantics = [#tpu.dimension_semantics<parallel>], iteration_bounds = array<i64: 1>, scalar_prefetch = 0 : i64, scratch_operands = 0 : i64, tpu.core_type = #tpu.core_type<tc>, window_params = [{transform_indices = @transform_0, window_bounds = array<i64: 4, 512>}, {transform_indices = @transform_1, window_bounds = array<i64: 4, 512>}]} {
    %c0 = arith.constant 0 : index
    %c0_0 = arith.constant 0 : index
    %0 = vector.load %arg1[%c0, %c0_0] : memref<4x512xf32, #tpu.memory_space<vmem>>, vector<4x512xf32>
    %cst = arith.constant 2.500000e-02 : f32
    %1 = vector.broadcast %cst : f32 to vector<4x512xf32>
    %2 = arith.divf %0, %1 : vector<4x512xf32>
    %3 = math.roundeven %2 : vector<4x512xf32>
    %cst_1 = arith.constant 1.280000e+02 : f32
    %4 = vector.broadcast %cst_1 : f32 to vector<4x512xf32>
    %5 = arith.addf %3, %4 : vector<4x512xf32>
    %cst_2 = arith.constant 0.000000e+00 : f32
    %cst_3 = arith.constant 2.550000e+02 : f32
    %6 = vector.broadcast %cst_2 : f32 to vector<4x512xf32>
    %7 = arith.maximumf %6, %5 : vector<4x512xf32>
    %8 = vector.broadcast %cst_3 : f32 to vector<4x512xf32>
    %9 = arith.minimumf %8, %7 : vector<4x512xf32>
    %cst_4 = arith.constant 1.280000e+02 : f32
    %10 = vector.broadcast %cst_4 : f32 to vector<4x512xf32>
    %11 = arith.subf %9, %10 : vector<4x512xf32>
    %cst_5 = arith.constant 2.500000e-02 : f32
    %12 = vector.broadcast %cst_5 : f32 to vector<4x512xf32>
    %13 = arith.mulf %11, %12 : vector<4x512xf32>
    %c0_6 = arith.constant 0 : index
    %c0_7 = arith.constant 0 : index
    %14 = vector.load %arg2[%c0_6, %c0_7] : memref<4x512xf32, #tpu.memory_space<vmem>>, vector<4x512xf32>
    tpu.vector_store %arg2[%c0_6, %c0_7], %13 {strides = array<i32>} : memref<4x512xf32, #tpu.memory_space<vmem>>, vector<4x512xf32>,
    return
  }
  func.func @transform_0(%arg0: i32) -> (i32, i32) {
    %c0_i32 = arith.constant 0 : i32
    %c0_i32_0 = arith.constant 0 : i32
    return %arg0, %c0_i32 : i32, i32
  }
  func.func @transform_1(%arg0: i32) -> (i32, i32) {
    %c0_i32 = arith.constant 0 : i32
    %c0_i32_0 = arith.constant 0 : i32
    return %arg0, %c0_i32 : i32, i32
  }
}

</mosaic_0001>

<llo_original>
// kernel: tpu_custom_call.1
$region0: #{tpu_custom_call.1}
  #allocation0 [shape = 'u32[]', space=smem, size = 0x4, offset = 0x4, fixed_abs, tag = 'smem constant byte address 0x4 - core index']
  #allocation1 [shape = 'u32[144,128]{1,0:T(1,128)}', space=vmem, size = 0x12000, scoped, tag = 'internal scratch']
  %s0 = inlined_call_operand.hbm [shape: f32[4,512], index: 0, kind: input, shape index: {}]
  %s1 = inlined_call_operand.hbm [shape: f32[4,512], index: 1, kind: output, shape index: {}]
  %s2 = sld [smem:[#allocation0]]
  $region18: #{tpu_custom_call.1} parent=0
    _
  %s4 = ssub.s32 1, %s2
  %s5 = scalar_select 0, %s4, %s2
  $region1: #{tpu_custom_call.1} parent=0
    #allocation2 [shape = 'u8[8192]{0}', space=vmem, size = 0x2000, scoped, tag = 'input window, operand 0, single buffered']
    #allocation3 [shape = 's32[1]{0}', space=sflag, size = 0x4, scoped, tag = 'scoped memory for tpu_custom_call.1']
    #allocation4 [shape = 's32[1]{0}', space=sflag, size = 0x4, scoped, tag = 'scoped memory for tpu_custom_call.1']
    #allocation5 [shape = 'u8[8192]{0}', space=vmem, size = 0x2000, scoped, tag = 'output window, operand 0, single buffered']
    %6 = vsyncpa [#allocation3], 0
    %7 = vsyncpa [#allocation4], 0
    // Predicated region
    $region2: #{tpu_custom_call.1} parent=1 // pred_check
      _
    $region3: #{tpu_custom_call.1} parent=1 // pred_check_branch
      %9 = sbr.rel (0) target = $region5
    $region4: #{tpu_custom_call.1} parent=1 // pred_region
      %s11 = ssub.s32 256, 256
      %12 = vsyncadd [#allocation3], %s11
      %s14 = sshll.u32 [#allocation2], 4
      %s15 = int_to_ptr.vmem [resolvable:$true] %s14
      %17 = dma.hbm_to_vmem [thread:$0]  %s0, 256, %s15, [#allocation3]
    $region5: #{tpu_custom_call.1} parent=1 // pred_fallthru
      _
    // Predicated region
    $region6: #{tpu_custom_call.1} parent=1 // pred_check
      _
    $region7: #{tpu_custom_call.1} parent=1 // pred_check_branch
      %19 = sbr.rel (0) target = $region9
    $region8: #{tpu_custom_call.1} parent=1 // pred_region
      %20 = dma.done [#allocation3], 256
    $region9: #{tpu_custom_call.1} parent=1 // pred_fallthru
      _
    %v21 = vld [vmem:[#allocation2] sm:$0xff]
    %v22 = vld [vmem:[#allocation2 + $0x8] sm:$0xff]
    %v23 = vrcp.pop 0.025
    %v24 = vmul.f32 %v21, %v23
    %v25 = vmul.f32 %v22, %v23
    %v26 = vround.ne.pseudo %v24
    %v27 = vround.ne.pseudo %v25
    %v28 = vadd.f32 %v26, 128.0
    %v29 = vadd.f32 %v27, 128.0
    %v30 = vmax.f32 %v28, 0.0
    %v31 = vmax.f32 %v29, 0.0
    %v32 = vmin.f32 %v30, 255.0
    %v33 = vmin.f32 %v31, 255.0
    %v34 = vsub.f32 %v32, 128.0
    %v35 = vsub.f32 %v33, 128.0
    %v36 = vmul.f32 %v34, 0.025
    %v37 = vmul.f32 %v35, 0.025
    %38 = vst [vmem:[#allocation5] sm:$0xff] %v36
    %39 = vst [vmem:[#allocation5 + $0x8] sm:$0xff] %v37
    // Predicated region
    $region10: #{tpu_custom_call.1} parent=1 // pred_check
      _
    $region11: #{tpu_custom_call.1} parent=1 // pred_check_branch
      %41 = sbr.rel (0) target = $region13
    $region12: #{tpu_custom_call.1} parent=1 // pred_region
      %s43 = ssub.s32 256, 256
      %44 = vsyncadd [#allocation4], %s43
      %s46 = sshll.u32 [#allocation5], 4
      %s47 = int_to_ptr.vmem [resolvable:$true] %s46
      %49 = dma.vmem_to_hbm [thread:$0]  %s47, 256, %s1, [#allocation4]
    $region13: #{tpu_custom_call.1} parent=1 // pred_fallthru
      _
    // Predicated region
    $region14: #{tpu_custom_call.1} parent=1 // pred_check
      _
    $region15: #{tpu_custom_call.1} parent=1 // pred_check_branch
      %51 = sbr.rel (0) target = $region17
    $region16: #{tpu_custom_call.1} parent=1 // pred_region
      %52 = dma.done [#allocation4], 256
    $region17: #{tpu_custom_call.1} parent=1 // pred_fallthru
      _
    %53 = vsyncpa [#allocation3], 1
    %54 = vsyncpa [#allocation4], 1

</llo_original>
